<compile_context>
chip_gen: v7x
topology: tpu7x:2x2x1
jax: 0.10.0
libtpu: 0.0.40
codegen_flags: <defaults>
</compile_context>

<pallas_src>
import numpy as np
import jax
import jax.numpy as jnp
from jax.experimental import pallas as pl
from jax.experimental.pallas import tpu as pltpu


# ----------------------------- wrapper-side helpers -----------------------------

def _conv3x3_toeplitz(w_hwio, W):
    """Build the (3*W*Cin, W*Cout) block-Toeplitz matrix for a 3x3 'same' conv.

    LHS layout expected by the kernel:
        X_cat[h, kh*(W*Cin) + ws*Cin + ci] = x[h + kh - 1, ws, ci]   (zero padded in h)
    so the W-shift (kw) and the W zero padding live entirely inside this matrix.

    Output column layout (pool-friendly): columns are ordered
        [ all even w | all odd w ],  each half ordered (w//2, Cout),
    so the kernel's W max-pool is a max of two contiguous lane halves.
    """
    KH, KW, Cin, Cout = w_hwio.shape
    sel = np.zeros((KW, W, W), np.float32)          # sel[kw, w_src, w_out]
    for kw in range(KW):
        for w in range(W):
            ws = w + kw - (KW // 2)
            if 0 <= ws < W:
                sel[kw, ws, w] = 1.0
    B = jnp.einsum('kpw,hkio->hpiwo', jnp.asarray(sel), w_hwio.astype(jnp.float32))
    perm = np.concatenate([np.arange(0, W, 2), np.arange(1, W, 2)])   # even w's, then odd w's
    B = B[:, :, :, perm, :]
    return B.reshape(KH * W * Cin, W * Cout)


# --------------------------------- kernel helpers --------------------------------

def _shift_cat(x):
    """x: (H, W*C) one image. Returns (H, 3*W*C) = [x[h-1], x[h], x[h+1]] blocks,
    zero-padded at the image top/bottom (the per-image grid block means there is
    no cross-image contamination, so no masks are needed)."""
    z = jnp.zeros((1, x.shape[1]), x.dtype)
    up = jnp.concatenate([z, x[:-1, :]], axis=0)    # row h reads row h-1   (kh = 0)
    dn = jnp.concatenate([x[1:, :], z], axis=0)     # row h reads row h+1   (kh = 2)
    return jnp.concatenate([up, x, dn], axis=1)


def _pool2x2(y):
    """2x2 stride-2 max pool on a (H, W*C) slab whose lanes are ordered
    [even-w half | odd-w half] (see _conv3x3_toeplitz).  Returns (H/2, (W/2)*C)
    with lanes in natural (w//2, C) order."""
    R, L = y.shape
    yh = y.reshape(R // 2, 2, L)
    yh = jnp.maximum(yh[:, 0, :], yh[:, 1, :])      # pool H: sublane pairs
    half = L // 2
    return jnp.maximum(yh[:, :half], yh[:, half:])  # pool W: contiguous lane halves


# ------------------------------------ kernel -------------------------------------

def net_fused_kernel(x_ref, w1t_ref, b1t_ref, w2t_ref, b2t_ref, o_ref):
    """Fused conv1 + pool1 + conv2 + pool2 for one image (one grid step).

    x_ref  : (H, W*C1)          lane-dense input slab
    w1t_ref: (3*W*C1, W*C2)     Toeplitz conv1 weights
    b1t_ref: (1, (W/2)*C2)      conv1 bias tiled over pooled W
    w2t_ref: (3*(W/2)*C2, (W/2)*C3)
    b2t_ref: (1, (W/4)*C3)
    o_ref  : (H/4, (W/4)*C3)    lane-dense output slab
    """
    x = x_ref[...]

    # conv1 (single MXU matmul) -> 2x2 max pool -> +bias
    a1 = jnp.dot(_shift_cat(x), w1t_ref[...], preferred_element_type=jnp.float32)
    y1 = _pool2x2(a1) + b1t_ref[...]                # (H/2, (W/2)*C2), intermediate stays in vregs

    # conv2 (single MXU matmul) -> 2x2 max pool -> +bias
    a2 = jnp.dot(_shift_cat(y1), w2t_ref[...], preferred_element_type=jnp.float32)
    y2 = _pool2x2(a2) + b2t_ref[...]                # (H/4, (W/4)*C3)

    o_ref[...] = y2.astype(o_ref.dtype)


# ------------------------------------ wrapper -------------------------------------

def net_forward_impl(x_nchw, params):
    x = jnp.transpose(x_nchw, (0, 2, 3, 1)).astype(jnp.float32)     # NCHW -> NHWC
    N, H, W, C1 = x.shape
    assert H % 4 == 0 and W % 4 == 0, "two 2x2 pools require H, W % 4 == 0"
    C2 = params["w1"].shape[-1]
    C3 = params["w2"].shape[-1]
    H2, W2, H3, W3 = H // 2, W // 2, H // 4, W // 4

    x2d = x.reshape(N, H, W * C1)                                   # lane-dense input slabs
    w1t = _conv3x3_toeplitz(params["w1"], W)                        # (3*W*C1, W*C2)
    w2t = _conv3x3_toeplitz(params["w2"], W2)                       # (3*W2*C2, W2*C3)
    b1t = jnp.tile(params["b1"].astype(jnp.float32), W2).reshape(1, W2 * C2)
    b2t = jnp.tile(params["b2"].astype(jnp.float32), W3).reshape(1, W3 * C3)

    out2d = pl.pallas_call(
        net_fused_kernel,
        out_shape=jax.ShapeDtypeStruct((N, H3, W3 * C3), jnp.float32),
        grid=(N,),
        in_specs=[
            pl.BlockSpec((None, H, W * C1), lambda n: (n, 0, 0)),           # per-image input
            pl.BlockSpec((3 * W * C1, W * C2), lambda n: (0, 0)),           # resident weights
            pl.BlockSpec((1, W2 * C2), lambda n: (0, 0)),
            pl.BlockSpec((3 * W2 * C2, W2 * C3), lambda n: (0, 0)),
            pl.BlockSpec((1, W3 * C3), lambda n: (0, 0)),
        ],
        out_specs=pl.BlockSpec((None, H3, W3 * C3), lambda n: (n, 0, 0)),   # lane-dense output slab
        compiler_params=pltpu.CompilerParams(
            dimension_semantics=("parallel",)),                             # 2 TCs on v7x
    )(x2d, w1t, b1t, w2t, b2t)

    out = out2d.reshape(N, H3, W3, C3)
    return jnp.transpose(out, (0, 3, 1, 2))                                 # NHWC -> NCHW


net_forward = jax.jit(net_forward_impl)


def init_params(key):
    k1, k2, k3, k4 = jax.random.split(key, 4)
    return {
        "w1": 0.1 * jax.random.normal(k1, (3, 3, 3, 4), jnp.float32),   # conv1 (HWIO)
        "b1": 0.1 * jax.random.normal(k2, (4,), jnp.float32),
        "w2": 0.1 * jax.random.normal(k3, (3, 3, 4, 8), jnp.float32),   # conv2 (HWIO)
        "b2": 0.1 * jax.random.normal(k4, (8,), jnp.float32),
    }


def ref_forward(x_nchw, params):
    """Pure-JAX reference (lax conv + reduce_window) for the correctness check."""
    def conv(x, w, b):
        y = jax.lax.conv_general_dilated(
            x, w, window_strides=(1, 1), padding="SAME",
            dimension_numbers=("NCHW", "HWIO", "NCHW"),
            precision=jax.lax.Precision.HIGHEST)
        return y + b.reshape(1, -1, 1, 1)

    def pool(x):
        return jax.lax.reduce_window(x, -jnp.inf, jax.lax.max,
                                     (1, 1, 2, 2), (1, 1, 2, 2), "VALID")

    x = pool(conv(x_nchw, params["w1"], params["b1"]))
    x = pool(conv(x, params["w2"], params["b2"]))
    return x


if __name__ == "__main__":
    key = jax.random.PRNGKey(0)
    kx, kp = jax.random.split(key)

    # PyTorch-style NCHW input: batch=2, channels=3, spatial=16x16
    x = jax.random.normal(kx, (2, 3, 16, 16), jnp.float32)
    params = init_params(kp)

    out = jax.block_until_ready(net_forward(x, params))
    assert out.shape == (2, 8, 4, 4), out.shape

    ref = jax.block_until_ready(ref_forward(x, params))
    assert jnp.allclose(out, ref, rtol=1e-2, atol=1e-3), \
        float(jnp.max(jnp.abs(out - ref)))

    print("KERNEL_OK")
</pallas_src>

<mosaic_0001>
module attributes {stable_mosaic.version = 11 : i64} {
  func.func @net_fused_kernel(%arg0: i32, %arg1: memref<1x16x48xf32, #tpu.memory_space<vmem>>, %arg2: memref<144x64xf32, #tpu.memory_space<vmem>>, %arg3: memref<1x32xf32, #tpu.memory_space<vmem>>, %arg4: memref<96x64xf32, #tpu.memory_space<vmem>>, %arg5: memref<1x32xf32, #tpu.memory_space<vmem>>, %arg6: memref<1x4x32xf32, #tpu.memory_space<vmem>>) attributes {dimension_semantics = [#tpu.dimension_semantics<parallel>], iteration_bounds = array<i64: 2>, scalar_prefetch = 0 : i64, scratch_operands = 0 : i64, tpu.core_type = #tpu.core_type<tc>, window_params = [{transform_indices = @transform_0, window_bounds = array<i64: 1, 16, 48>}, {pipeline_mode = #tpu.pipeline_mode<synchronous>, transform_indices = @transform_1, window_bounds = array<i64: 144, 64>}, {pipeline_mode = #tpu.pipeline_mode<synchronous>, transform_indices = @transform_2, window_bounds = array<i64: 1, 32>}, {pipeline_mode = #tpu.pipeline_mode<synchronous>, transform_indices = @transform_3, window_bounds = array<i64: 96, 64>}, {pipeline_mode = #tpu.pipeline_mode<synchronous>, transform_indices = @transform_4, window_bounds = array<i64: 1, 32>}, {transform_indices = @transform_5, window_bounds = array<i64: 1, 4, 32>}]} {
    %c0 = arith.constant 0 : index
    %c0_0 = arith.constant 0 : index
    %c0_1 = arith.constant 0 : index
    %0 = vector.load %arg1[%c0, %c0_0, %c0_1] : memref<1x16x48xf32, #tpu.memory_space<vmem>>, vector<1x16x48xf32>
    %1 = vector.shape_cast %0 : vector<1x16x48xf32> to vector<16x48xf32>
    %cst = arith.constant 0.000000e+00 : f32
    %2 = vector.broadcast %cst : f32 to vector<1x48xf32>
    %3 = vector.extract_strided_slice %1 {offsets = [0, 0], sizes = [15, 48], strides = [1, 1]} : vector<16x48xf32> to vector<15x48xf32>
    %4 = tpu.concatenate %2, %3 in 0 : vector<1x48xf32>, vector<15x48xf32> -> vector<16x48xf32>
    %5 = vector.extract_strided_slice %1 {offsets = [1, 0], sizes = [15, 48], strides = [1, 1]} : vector<16x48xf32> to vector<15x48xf32>
    %6 = tpu.concatenate %5, %2 in 0 : vector<15x48xf32>, vector<1x48xf32> -> vector<16x48xf32>
    %7 = tpu.concatenate %4, %1, %6 in 1 : vector<16x48xf32>, vector<16x48xf32>, vector<16x48xf32> -> vector<16x144xf32>
    %c0_2 = arith.constant 0 : index
    %c0_3 = arith.constant 0 : index
    %8 = vector.load %arg2[%c0_2, %c0_3] : memref<144x64xf32, #tpu.memory_space<vmem>>, vector<144x64xf32>
    %cst_4 = arith.constant dense<0.000000e+00> : vector<16x64xf32>
    %9 = tpu.matmul %7, %8, %cst_4 {dimension_numbers = #tpu.dot_dimension_numbers<[1], [0], [0], [1], [0, 0, 1, 1], [], []>} : vector<16x144xf32>, vector<144x64xf32>, vector<16x64xf32> -> vector<16x64xf32>
    %10 = vector.shape_cast %9 : vector<16x64xf32> to vector<8x2x64xf32>
    %11 = vector.extract_strided_slice %10 {offsets = [0, 0, 0], sizes = [8, 1, 64], strides = [1, 1, 1]} : vector<8x2x64xf32> to vector<8x1x64xf32>
    %12 = vector.shape_cast %11 : vector<8x1x64xf32> to vector<8x64xf32>
    %13 = vector.extract_strided_slice %10 {offsets = [0, 1, 0], sizes = [8, 1, 64], strides = [1, 1, 1]} : vector<8x2x64xf32> to vector<8x1x64xf32>
    %14 = vector.shape_cast %13 : vector<8x1x64xf32> to vector<8x64xf32>
    %15 = arith.maximumf %12, %14 : vector<8x64xf32>
    %16 = vector.extract_strided_slice %15 {offsets = [0, 0], sizes = [8, 32], strides = [1, 1]} : vector<8x64xf32> to vector<8x32xf32>
    %17 = vector.extract_strided_slice %15 {offsets = [0, 32], sizes = [8, 32], strides = [1, 1]} : vector<8x64xf32> to vector<8x32xf32>
    %18 = arith.maximumf %16, %17 : vector<8x32xf32>
    %c0_5 = arith.constant 0 : index
    %c0_6 = arith.constant 0 : index
    %19 = vector.load %arg3[%c0_5, %c0_6] : memref<1x32xf32, #tpu.memory_space<vmem>>, vector<1x32xf32>
    %20 = vector.broadcast %19 : vector<1x32xf32> to vector<8x32xf32>
    %21 = arith.addf %18, %20 : vector<8x32xf32>
    %cst_7 = arith.constant 0.000000e+00 : f32
    %22 = vector.broadcast %cst_7 : f32 to vector<1x32xf32>
    %23 = vector.extract_strided_slice %21 {offsets = [0, 0], sizes = [7, 32], strides = [1, 1]} : vector<8x32xf32> to vector<7x32xf32>
    %24 = tpu.concatenate %22, %23 in 0 : vector<1x32xf32>, vector<7x32xf32> -> vector<8x32xf32>
    %25 = vector.extract_strided_slice %21 {offsets = [1, 0], sizes = [7, 32], strides = [1, 1]} : vector<8x32xf32> to vector<7x32xf32>
    %26 = tpu.concatenate %25, %22 in 0 : vector<7x32xf32>, vector<1x32xf32> -> vector<8x32xf32>
    %27 = tpu.concatenate %24, %21, %26 in 1 : vector<8x32xf32>, vector<8x32xf32>, vector<8x32xf32> -> vector<8x96xf32>
    %c0_8 = arith.constant 0 : index
    %c0_9 = arith.constant 0 : index
    %28 = vector.load %arg4[%c0_8, %c0_9] : memref<96x64xf32, #tpu.memory_space<vmem>>, vector<96x64xf32>
    %cst_10 = arith.constant dense<0.000000e+00> : vector<8x64xf32>
    %29 = tpu.matmul %27, %28, %cst_10 {dimension_numbers = #tpu.dot_dimension_numbers<[1], [0], [0], [1], [0, 0, 1, 1], [], []>} : vector<8x96xf32>, vector<96x64xf32>, vector<8x64xf32> -> vector<8x64xf32>
    %30 = vector.shape_cast %29 : vector<8x64xf32> to vector<4x2x64xf32>
    %31 = vector.extract_strided_slice %30 {offsets = [0, 0, 0], sizes = [4, 1, 64], strides = [1, 1, 1]} : vector<4x2x64xf32> to vector<4x1x64xf32>
    %32 = vector.shape_cast %31 : vector<4x1x64xf32> to vector<4x64xf32>
    %33 = vector.extract_strided_slice %30 {offsets = [0, 1, 0], sizes = [4, 1, 64], strides = [1, 1, 1]} : vector<4x2x64xf32> to vector<4x1x64xf32>
    %34 = vector.shape_cast %33 : vector<4x1x64xf32> to vector<4x64xf32>
    %35 = arith.maximumf %32, %34 : vector<4x64xf32>
    %36 = vector.extract_strided_slice %35 {offsets = [0, 0], sizes = [4, 32], strides = [1, 1]} : vector<4x64xf32> to vector<4x32xf32>
    %37 = vector.extract_strided_slice %35 {offsets = [0, 32], sizes = [4, 32], strides = [1, 1]} : vector<4x64xf32> to vector<4x32xf32>
    %38 = arith.maximumf %36, %37 : vector<4x32xf32>
    %c0_11 = arith.constant 0 : index
    %c0_12 = arith.constant 0 : index
    %39 = vector.load %arg5[%c0_11, %c0_12] : memref<1x32xf32, #tpu.memory_space<vmem>>, vector<1x32xf32>
    %40 = vector.broadcast %39 : vector<1x32xf32> to vector<4x32xf32>
    %41 = arith.addf %38, %40 : vector<4x32xf32>
    %c0_13 = arith.constant 0 : index
    %c0_14 = arith.constant 0 : index
    %c0_15 = arith.constant 0 : index
    %42 = vector.load %arg6[%c0_13, %c0_14, %c0_15] : memref<1x4x32xf32, #tpu.memory_space<vmem>>, vector<1x4x32xf32>
    %43 = vector.shape_cast %42 : vector<1x4x32xf32> to vector<4x32xf32>
    %44 = vector.shape_cast %41 : vector<4x32xf32> to vector<1x4x32xf32>
    tpu.vector_store %arg6[%c0_13, %c0_14, %c0_15], %44 {strides = array<i32>} : memref<1x4x32xf32, #tpu.memory_space<vmem>>, vector<1x4x32xf32>,
    return
  }
  func.func @transform_0(%arg0: i32) -> (i32, i32, i32) {
    %c0_i32 = arith.constant 0 : i32
    %c0_i32_0 = arith.constant 0 : i32
    %c0_i32_1 = arith.constant 0 : i32
    return %arg0, %c0_i32, %c0_i32_0 : i32, i32, i32
  }
  func.func @transform_1(%arg0: i32) -> (i32, i32) {
    %c0_i32 = arith.constant 0 : i32
    %c0_i32_0 = arith.constant 0 : i32
    %c0_i32_1 = arith.constant 0 : i32
    return %c0_i32, %c0_i32_0 : i32, i32
  }
  func.func @transform_2(%arg0: i32) -> (i32, i32) {
    %c0_i32 = arith.constant 0 : i32
    %c0_i32_0 = arith.constant 0 : i32
    %c0_i32_1 = arith.constant 0 : i32
    return %c0_i32, %c0_i32_0 : i32, i32
  }
  func.func @transform_3(%arg0: i32) -> (i32, i32) {
    %c0_i32 = arith.constant 0 : i32
    %c0_i32_0 = arith.constant 0 : i32
    %c0_i32_1 = arith.constant 0 : i32
    return %c0_i32, %c0_i32_0 : i32, i32
  }
  func.func @transform_4(%arg0: i32) -> (i32, i32) {
    %c0_i32 = arith.constant 0 : i32
    %c0_i32_0 = arith.constant 0 : i32
    %c0_i32_1 = arith.constant 0 : i32
    return %c0_i32, %c0_i32_0 : i32, i32
  }
  func.func @transform_5(%arg0: i32) -> (i32, i32, i32) {
    %c0_i32 = arith.constant 0 : i32
    %c0_i32_0 = arith.constant 0 : i32
    %c0_i32_1 = arith.constant 0 : i32
    return %arg0, %c0_i32, %c0_i32_0 : i32, i32, i32
  }
}

</mosaic_0001>

<llo_original>
// kernel: tile.13
$region0: #{tile.13}
  #allocation0 [shape = 's32[1]{0}', space=sflag, size = 0x4, scoped, tag = 'scoped memory for tile.13']
  %s0 = inlined_call_operand.vmem [shape: f32[4], index: 0, kind: input, shape index: {}]
  %s1 = inlined_call_operand.vmem [shape: f32[8,4], index: 1, kind: output, shape index: {}]
  // Predicated region
  $region2: #{tile.13} parent=0 // pred_check
    _
  $region3: #{tile.13} parent=0 // pred_check_branch
    %3 = sbr.rel (0) target = $region5
  $region4: #{tile.13} parent=0 // pred_region
    _
  $region5: #{tile.13} parent=0 // pred_fallthru
    _
  %v4 = vld [vmem:[%s0] ss:$0 sm:$0xff]
  %5 = vst [vmem:[%s1] sm:$0xff] %v4

// kernel: tile.14
$region0: #{tile.14}
  %s0 = inlined_call_operand.vmem [shape: f32[8,4], index: 0, kind: input, shape index: {}]
  %s1 = inlined_call_operand.vmem [shape: f32[1,32], index: 1, kind: output, shape index: {}]
  $region1: #{tile.14} parent=0
    #allocation0 [shape = 'u8[4096]{0}', space=vmem, size = 0x1000, scoped, tag = 'scoped mem for output reshape']
    %v2 = vld [vmem:[%s0] sm:$0x1]
    %vm3 = vcmask 31744
    %4 = vst.msk [vmem:[#allocation0] sm:$0x1] %vm3, %v2
    %s5 = scalar_lea.vmem %s0, 7
    %v6 = vld [vmem:[%s5] sm:$0x1]
    %7 = vrot.lane.b32.xlu0 %v6, 28
    %v8 = vpop.permute.xlu0 %7
    %vm9 = vcmask 261344
    %10 = vst.msk [vmem:[#allocation0] sm:$0x1] %vm9, %v8
    %s11 = scalar_lea.vmem %s0, 6
    %v12 = vld [vmem:[%s11] sm:$0x1]
    %13 = vrot.lane.b32.xlu0 %v12, 24
    %v14 = vpop.permute.xlu0 %13
    %vm15 = vcmask 228544
    %16 = vst.msk [vmem:[#allocation0] sm:$0x1] %vm15, %v14
    %s17 = scalar_lea.vmem %s0, 5
    %v18 = vld [vmem:[%s17] sm:$0x1]
    %19 = vrot.lane.b32.xlu0 %v18, 20
    %v20 = vpop.permute.xlu0 %19
    %vm21 = vcmask 195744
    %22 = vst.msk [vmem:[#allocation0] sm:$0x1] %vm21, %v20
    %s23 = scalar_lea.vmem %s0, 4
    %v24 = vld [vmem:[%s23] sm:$0x1]
    %25 = vrot.lane.b32.xlu0 %v24, 16
    %v26 = vpop.permute.xlu0 %25
    %vm27 = vcmask 162944
    %28 = vst.msk [vmem:[#allocation0] sm:$0x1] %vm27, %v26
    %s29 = scalar_lea.vmem %s0, 3
    %v30 = vld [vmem:[%s29] sm:$0x1]
    %31 = vrot.lane.b32.xlu0 %v30, 12
    %v32 = vpop.permute.xlu0 %31
    %vm33 = vcmask 130144
    %34 = vst.msk [vmem:[#allocation0] sm:$0x1] %vm33, %v32
    %s35 = scalar_lea.vmem %s0, 2
    %v36 = vld [vmem:[%s35] sm:$0x1]
    %37 = vrot.lane.b32.xlu0 %v36, 8
    %v38 = vpop.permute.xlu0 %37
    %vm39 = vcmask 97344
    %40 = vst.msk [vmem:[#allocation0] sm:$0x1] %vm39, %v38
    %s41 = scalar_lea.vmem %s0, 1
    %v42 = vld [vmem:[%s41] sm:$0x1]
    %43 = vrot.lane.b32.xlu0 %v42, 4
    %v44 = vpop.permute.xlu0 %43
    %vm45 = vcmask 64544
    %46 = vst.msk [vmem:[#allocation0] sm:$0x1] %vm45, %v44
    %s48 = sshllo.u32 0, 1
    %v50 = vld [vmem:[#allocation0] sm:%s48]
    %s51 = sshllo.u32 0, 1
    %52 = vst [vmem:[%s1] sm:%s51] %v50

// kernel: tile.18
$region0: #{tile.18}
  #allocation0 [shape = 's32[1]{0}', space=sflag, size = 0x4, scoped, tag = 'scoped memory for tile.18']
  %s0 = inlined_call_operand.vmem [shape: f32[8], index: 0, kind: input, shape index: {}]
  %s1 = inlined_call_operand.vmem [shape: f32[4,8], index: 1, kind: output, shape index: {}]
  // Predicated region
  $region2: #{tile.18} parent=0 // pred_check
    _
  $region3: #{tile.18} parent=0 // pred_check_branch
    %3 = sbr.rel (0) target = $region5
  $region4: #{tile.18} parent=0 // pred_region
    _
  $region5: #{tile.18} parent=0 // pred_fallthru
    _
  %v4 = vld [vmem:[%s0] ss:$0 sm:$0xff]
  %5 = vst [vmem:[%s1] sm:$0xf] %v4

// kernel: tile.19
$region0: #{tile.19}
  %s0 = inlined_call_operand.vmem [shape: f32[4,8], index: 0, kind: input, shape index: {}]
  %s1 = inlined_call_operand.vmem [shape: f32[1,32], index: 1, kind: output, shape index: {}]
  $region1: #{tile.19} parent=0
    #allocation0 [shape = 'u8[4096]{0}', space=vmem, size = 0x1000, scoped, tag = 'scoped mem for output reshape']
    #allocation1 [shape = 'u8[4096]{0}', space=vmem, size = 0x1000, scoped, tag = 'scoped mem for input reshape']
    %s3 = sshllo.u32 0, 4
    %v4 = vld [vmem:[%s0] sm:%s3]
    %5 = vst [vmem:[#allocation1] sm:%s3] %v4
    %v6 = vld [vmem:[#allocation1] sm:$0x1]
    %vm7 = vcmask 64512
    %8 = vst.msk [vmem:[#allocation0] sm:$0x1] %vm7, %v6
    %s9 = scalar_lea.vmem [#allocation1], 3
    %v10 = vld [vmem:[%s9] sm:$0x1]
    %11 = vrot.lane.b32.xlu0 %v10, 24
    %v12 = vpop.permute.xlu0 %11
    %vm13 = vcmask 261312
    %14 = vst.msk [vmem:[#allocation0] sm:$0x1] %vm13, %v12
    %s15 = scalar_lea.vmem [#allocation1], 2
    %v16 = vld [vmem:[%s15] sm:$0x1]
    %17 = vrot.lane.b32.xlu0 %v16, 16
    %v18 = vpop.permute.xlu0 %17
    %vm19 = vcmask 195712
    %20 = vst.msk [vmem:[#allocation0] sm:$0x1] %vm19, %v18
    %s21 = scalar_lea.vmem [#allocation1], 1
    %v22 = vld [vmem:[%s21] sm:$0x1]
    %23 = vrot.lane.b32.xlu0 %v22, 8
    %v24 = vpop.permute.xlu0 %23
    %vm25 = vcmask 130112
    %26 = vst.msk [vmem:[#allocation0] sm:$0x1] %vm25, %v24
    %s28 = sshllo.u32 0, 1
    %v30 = vld [vmem:[#allocation0] sm:%s28]
    %s31 = sshllo.u32 0, 1
    %32 = vst [vmem:[%s1] sm:%s31] %v30

// kernel: net_forward_impl.1
$region0: #{net_forward_impl.1}
  #allocation0 [shape = 'u32[]', space=smem, size = 0x4, offset = 0x4, fixed_abs, tag = 'smem constant byte address 0x4 - core index']
  #allocation1 [shape = 'u32[144,128]{1,0:T(1,128)}', space=vmem, size = 0x12000, scoped, tag = 'internal scratch']
  %s0 = inlined_call_operand.vmem [shape: f32[2,16,48], index: 0, kind: input, shape index: {}]
  %s1 = inlined_call_operand.vmem [shape: f32[144,64], index: 1, kind: input, shape index: {}]
  %s2 = inlined_call_operand.vmem [shape: f32[1,32], index: 2, kind: input, shape index: {}]
  %s3 = inlined_call_operand.vmem [shape: f32[96,64], index: 3, kind: input, shape index: {}]
  %s4 = inlined_call_operand.vmem [shape: f32[1,32], index: 4, kind: input, shape index: {}]
  %s5 = inlined_call_operand.vmem [shape: f32[2,4,32], index: 5, kind: output, shape index: {}]
  %s6 = sld [smem:[#allocation0]]
  $region53: #{net_forward_impl.1} parent=0
    _
  %s8 = ssub.s32 1, %s6
  %s9 = scalar_select 0, %s8, %s6
  loop: start=0, step=1, limit=4
  $region2: #{net_forward_impl.1} parent=0 // loop_pre_header
    _
  $region3: #{net_forward_impl.1} parent=0 // loop_header
    %s11 = sphi 0, %s15
    %p12 = scmp.ge.s32.totalorder %s11, 4
    %s21 = sphi 0, %s23
    %s24 = sphi 0, %s21
    %s25 = sphi 0, %s24
    %s41 = sphi 0, %s25
    %s45 = sphi 0, %s45
    %s47 = sphi 0, %s45
    %s48 = sphi 0, %s47
    %s62 = sphi 0, %s48
    %s66 = sphi 0, %s66
    %s68 = sphi 0, %s66
    %s69 = sphi 0, %s68
    %s83 = sphi 0, %s69
    %s87 = sphi 0, %s87
    %s89 = sphi 0, %s87
    %s90 = sphi 0, %s89
    %s104 = sphi 0, %s90
    %s108 = sphi 0, %s108
    %s110 = sphi 0, %s108
    %s111 = sphi 0, %s110
    %s125 = sphi 0, %s111
    %s131 = sphi 0, %s133
    %s134 = sphi 0, %s131
    %s135 = sphi 0, %s134
    %s151 = sphi 0, %s135
  $region4: #{net_forward_impl.1} parent=0 // loop_header_branch
    %14 = sbr.rel (%p12) target = $region8
  $region5: #{net_forward_impl.1} parent=0 // loop_body
    %s16 = ssub.s32 %s11, 1
    %s17 = ssub.s32 %s11, 2
    %s18 = sadd.s32 %s11, 1
    %s19 = ssub.s32 %s11, %s18
    %p20 = scmp.eq.s32.totalorder %s19, 0
    %s22 = sadd.s32 %s21, 1
    %s23 = scalar_select %p20, %s21, %s22
    %p26 = pneg %p20
    %p27 = scmp.eq.s32.totalorder %s11, 1
    %p28 = por %p26, %p27
    %p29 = scmp.ne.s32.totalorder %s21, %s24
    %p30 = scmp.eq.s32.totalorder %s11, 0
    %p31 = por %p29, %p30
    %p32 = scmp.ne.s32.totalorder %s21, %s24
    %p33 = scmp.eq.s32.totalorder %s16, 1
    %p34 = por %p32, %p33
    %p35 = scmp.ne.s32.totalorder %s24, %s25
    %p36 = scmp.eq.s32.totalorder %s16, 0
    %p37 = por %p35, %p36
    %p38 = scmp.ne.s32.totalorder %s24, %s25
    %p39 = scmp.eq.s32.totalorder %s17, 1
    %p40 = por %p38, %p39
    %p42 = scmp.ne.s32.totalorder %s25, %s41
    %p43 = scmp.eq.s32.totalorder %s17, 0
    %p44 = por %p42, %p43
    %s46 = sadd.s32 %s45, 1
    %p49 = scmp.eq.s32.totalorder %s11, 1
    %p50 = scmp.ne.s32.totalorder %s45, %s47
    %p51 = scmp.eq.s32.totalorder %s11, 0
    %p52 = por %p50, %p51
    %p53 = scmp.ne.s32.totalorder %s45, %s47
    %p54 = scmp.eq.s32.totalorder %s16, 1
    %p55 = por %p53, %p54
    %p56 = scmp.ne.s32.totalorder %s47, %s48
    %p57 = scmp.eq.s32.totalorder %s16, 0
    %p58 = por %p56, %p57
    %p59 = scmp.ne.s32.totalorder %s47, %s48
    %p60 = scmp.eq.s32.totalorder %s17, 1
    %p61 = por %p59, %p60
    %p63 = scmp.ne.s32.totalorder %s48, %s62
    %p64 = scmp.eq.s32.totalorder %s17, 0
    %p65 = por %p63, %p64
    %s67 = sadd.s32 %s66, 1
    %p70 = scmp.eq.s32.totalorder %s11, 1
    %p71 = scmp.ne.s32.totalorder %s66, %s68
    %p72 = scmp.eq.s32.totalorder %s11, 0
    %p73 = por %p71, %p72
    %p74 = scmp.ne.s32.totalorder %s66, %s68
    %p75 = scmp.eq.s32.totalorder %s16, 1
    %p76 = por %p74, %p75
    %p77 = scmp.ne.s32.totalorder %s68, %s69
    %p78 = scmp.eq.s32.totalorder %s16, 0
    %p79 = por %p77, %p78
    %p80 = scmp.ne.s32.totalorder %s68, %s69
    %p81 = scmp.eq.s32.totalorder %s17, 1
    %p82 = por %p80, %p81
    %p84 = scmp.ne.s32.totalorder %s69, %s83
    %p85 = scmp.eq.s32.totalorder %s17, 0
    %p86 = por %p84, %p85
    %s88 = sadd.s32 %s87, 1
    %p91 = scmp.eq.s32.totalorder %s11, 1
    %p92 = scmp.ne.s32.totalorder %s87, %s89
    %p93 = scmp.eq.s32.totalorder %s11, 0
    %p94 = por %p92, %p93
    %p95 = scmp.ne.s32.totalorder %s87, %s89
    %p96 = scmp.eq.s32.totalorder %s16, 1
    %p97 = por %p95, %p96
    %p98 = scmp.ne.s32.totalorder %s89, %s90
    %p99 = scmp.eq.s32.totalorder %s16, 0
    %p100 = por %p98, %p99
    %p101 = scmp.ne.s32.totalorder %s89, %s90
    %p102 = scmp.eq.s32.totalorder %s17, 1
    %p103 = por %p101, %p102
    %p105 = scmp.ne.s32.totalorder %s90, %s104
    %p106 = scmp.eq.s32.totalorder %s17, 0
    %p107 = por %p105, %p106
    %s109 = sadd.s32 %s108, 1
    %p112 = scmp.eq.s32.totalorder %s11, 1
    %p113 = scmp.ne.s32.totalorder %s108, %s110
    %p114 = scmp.eq.s32.totalorder %s11, 0
    %p115 = por %p113, %p114
    %p116 = scmp.ne.s32.totalorder %s108, %s110
    %p117 = scmp.eq.s32.totalorder %s16, 1
    %p118 = por %p116, %p117
    %p119 = scmp.ne.s32.totalorder %s110, %s111
    %p120 = scmp.eq.s32.totalorder %s16, 0
    %p121 = por %p119, %p120
    %p122 = scmp.ne.s32.totalorder %s110, %s111
    %p123 = scmp.eq.s32.totalorder %s17, 1
    %p124 = por %p122, %p123
    %p126 = scmp.ne.s32.totalorder %s111, %s125
    %p127 = scmp.eq.s32.totalorder %s17, 0
    %p128 = por %p126, %p127
    %s129 = ssub.s32 %s11, %s18
    %p130 = scmp.eq.s32.totalorder %s129, 0
    %s132 = sadd.s32 %s131, 1
    %s133 = scalar_select %p130, %s131, %s132
    %p136 = pneg %p130
    %p137 = scmp.eq.s32.totalorder %s11, 1
    %p138 = por %p136, %p137
    %p139 = scmp.ne.s32.totalorder %s131, %s134
    %p140 = scmp.eq.s32.totalorder %s11, 0
    %p141 = por %p139, %p140
    %p142 = scmp.ne.s32.totalorder %s131, %s134
    %p143 = scmp.eq.s32.totalorder %s16, 1
    %p144 = por %p142, %p143
    %p145 = scmp.ne.s32.totalorder %s134, %s135
    %p146 = scmp.eq.s32.totalorder %s16, 0
    %p147 = por %p145, %p146
    %p148 = scmp.ne.s32.totalorder %s134, %s135
    %p149 = scmp.eq.s32.totalorder %s17, 1
    %p150 = por %p148, %p149
    %p152 = scmp.ne.s32.totalorder %s135, %s151
    %p153 = scmp.eq.s32.totalorder %s17, 0
    %p154 = por %p152, %p153
    %p155 = scmp.le.s32.totalorder 1, %s11
    %p156 = scmp.lt.s32.totalorder %s11, 3
    %p157 = pnand %p155, %p156
    %p158 = pneg %p157
    // Predicated region
    $region9: #{net_forward_impl.1} parent=5 // pred_check
      _
    $region10: #{net_forward_impl.1} parent=5 // pred_check_branch
      %160 = sbr.rel (%p157) target = $region12
    $region11: #{net_forward_impl.1} parent=5 // pred_region
      %s161 = ssub.s32 %s11, 1
      // Predicated region
      $region13: #{net_forward_impl.1} parent=11 // pred_check
        %p162 = pneg %p58
      $region14: #{net_forward_impl.1} parent=11 // pred_check_branch
        %164 = sbr.rel (%p162) target = $region16
      $region15: #{net_forward_impl.1} parent=11 // pred_region
        _
      $region16: #{net_forward_impl.1} parent=11 // pred_fallthru
        _
      // Predicated region
      $region17: #{net_forward_impl.1} parent=11 // pred_check
        %p165 = pneg %p79
      $region18: #{net_forward_impl.1} parent=11 // pred_check_branch
        %167 = sbr.rel (%p165) target = $region20
      $region19: #{net_forward_impl.1} parent=11 // pred_region
        _
      $region20: #{net_forward_impl.1} parent=11 // pred_fallthru
        _
      // Predicated region
      $region21: #{net_forward_impl.1} parent=11 // pred_check
        %p168 = pneg %p100
      $region22: #{net_forward_impl.1} parent=11 // pred_check_branch
        %170 = sbr.rel (%p168) target = $region24
      $region23: #{net_forward_impl.1} parent=11 // pred_region
        _
      $region24: #{net_forward_impl.1} parent=11 // pred_fallthru
        _
      // Predicated region
      $region25: #{net_forward_impl.1} parent=11 // pred_check
        %p171 = pneg %p121
      $region26: #{net_forward_impl.1} parent=11 // pred_check_branch
        %173 = sbr.rel (%p171) target = $region28
      $region27: #{net_forward_impl.1} parent=11 // pred_region
        _
      $region28: #{net_forward_impl.1} parent=11 // pred_fallthru
        _
    $region12: #{net_forward_impl.1} parent=5 // pred_fallthru
      _
    %p174 = scmp.lt.s32.totalorder %s11, 2
    // Predicated region
    $region29: #{net_forward_impl.1} parent=5 // pred_check
      %p175 = pneg %p174
    $region30: #{net_forward_impl.1} parent=5 // pred_check_branch
      %177 = sbr.rel (%p175) target = $region32
    $region31: #{net_forward_impl.1} parent=5 // pred_region
      // Predicated region
      $region33: #{net_forward_impl.1} parent=31 // pred_check
        %p178 = pneg %p31
      $region34: #{net_forward_impl.1} parent=31 // pred_check_branch
        %180 = sbr.rel (%p178) target = $region36
      $region35: #{net_forward_impl.1} parent=31 // pred_region
        %p181 = scmp.lt.s32.totalorder %s11, 1
        %s182 = scalar_select %p181, %s11, 1
        %s183 = smul.addr %s182, 2
        %s184 = smul.addr %s183, 8
        %s185 = scalar_lea.vmem %s0, %s184
      $region36: #{net_forward_impl.1} parent=31 // pred_fallthru
        _
    $region32: #{net_forward_impl.1} parent=5 // pred_fallthru
      _
    %p186 = scmp.le.s32.totalorder 1, %s11
    %p187 = scmp.lt.s32.totalorder %s11, 3
    %p188 = pnand %p186, %p187
    %p189 = pneg %p188
    // Predicated region
    $region37: #{net_forward_impl.1} parent=5 // pred_check
      _
    $region38: #{net_forward_impl.1} parent=5 // pred_check_branch
      %191 = sbr.rel (%p188) target = $region40
    $region39: #{net_forward_impl.1} parent=5 // pred_region
      %s192 = ssub.s32 %s11, 1
      %p193 = scmp.lt.s32.totalorder %s16, 1
      %s194 = scalar_select %p193, %s16, 1
      %s195 = smul.addr %s194, 2
      %s196 = smul.addr %s195, 8
      %s197 = scalar_lea.vmem %s0, %s196
      %p198 = pneg %p37
      %p199 = pneg %p34
      %p200 = pneg %p58
      %p201 = pneg %p55
      %p202 = pneg %p79
      %p203 = pneg %p76
      %p204 = pneg %p100
      %p205 = pneg %p97
      %p206 = pneg %p121
      %p207 = pneg %p118
      %p208 = pneg %p147
      %p209 = pneg %p144
      %p210 = scmp.lt.s32.totalorder %s16, 1
      %s211 = scalar_select %p210, %s16, 1
      %s212 = smul.addr %s211, 4
      %s213 = scalar_lea.vmem %s5, %s212
      %p214 = scmp.lt.s32.totalorder %s16, 1
      %s215 = scalar_select %p214, %s16, 1
      %s216 = smul.addr %s215, 2
      %s217 = smul.addr %s216, 8
      %s218 = scalar_lea.vmem %s0, %s217
      %p219 = scmp.lt.s32.totalorder %s16, 1
      %s220 = scalar_select %p219, %s16, 1
      %s221 = smul.addr %s220, 4
      %s222 = scalar_lea.vmem %s5, %s221
      %v223 = vld [vmem:[%s218] sm:$0xff]
      %v224 = vld [vmem:[%s218 + $0x8] sm:$0xff]
      %vm227 = vcmask 1040384
      %v228 = vrot.slane %v223, 7
      %v229 = vrot.slane %v224, 7
      %v230 = vsel %vm227, %v228, %v229
      %v233 = vsel %vm227, 0.0, %v228
      %vm234 = vcmask 1046528
      %v235 = vrot.slane %v223, 1
      %v236 = vrot.slane %v224, 1
      %v237 = vsel %vm234, %v235, %v236
      %v239 = vsel %vm234, %v236, 0.0
      %240 = vrot.lane.b32.xlu0 %v223, 48
      %v241 = vpop.permute.xlu0 %240
      %242 = vrot.lane.b32.xlu0 %v224, 48
      %v243 = vpop.permute.xlu0 %242
      %247 = vrot.lane.b32.xlu0 %v237, 96
      %v248 = vpop.permute.xlu0 %247
      %249 = vrot.lane.b32.xlu0 %v239, 96
      %v250 = vpop.permute.xlu0 %249
      %vm253 = vcmask 392192
      %v254 = vsel %vm253, %v233, %v241
      %v255 = vsel %vm253, %v230, %v243
      %vm256 = vcmask 785408
      %v257 = vsel %vm256, %v254, %v248
      %v258 = vsel %vm256, %v255, %v250
      %v259 = vld [vmem:[%s1] sm:$0xff]
      %v260 = vld [vmem:[%s1 + $0x8] sm:$0xff]
      %v261 = vld [vmem:[%s1 + $0x10] sm:$0xff]
      %v262 = vld [vmem:[%s1 + $0x18] sm:$0xff]
      %v263 = vld [vmem:[%s1 + $0x20] sm:$0xff]
      %v264 = vld [vmem:[%s1 + $0x28] sm:$0xff]
      %v265 = vld [vmem:[%s1 + $0x30] sm:$0xff]
      %v266 = vld [vmem:[%s1 + $0x38] sm:$0xff]
      %v267 = vld [vmem:[%s1 + $0x40] sm:$0xff]
      %v268 = vld [vmem:[%s1 + $0x48] sm:$0xff]
      %v269 = vld [vmem:[%s1 + $0x50] sm:$0xff]
      %v270 = vld [vmem:[%s1 + $0x58] sm:$0xff]
      %v271 = vld [vmem:[%s1 + $0x60] sm:$0xff]
      %v272 = vld [vmem:[%s1 + $0x68] sm:$0xff]
      %v273 = vld [vmem:[%s1 + $0x70] sm:$0xff]
      %v274 = vld [vmem:[%s1 + $0x78] sm:$0xff]
      %v275 = vld [vmem:[%s1 + $0x80] sm:$0xff]
      %v276 = vld [vmem:[%s1 + $0x88] sm:$0xff]
      %vm277 = vcmask 130048
      %v278 = vsel %vm277, %v248, 0
      %v280 = vsel %vm277, %v250, 0
      %282 = vmatprep.subr.mxu0 0.0
      %283 = vmatpush1.msra.mxu0 %v259
      %284 = vmatprep.subr.mxu0 0.0
      %285 = vmatpush1.msra.mxu0 %v260
      %286 = vmatprep.subr.mxu0 0.0
      %287 = vmatpush1.msra.mxu0 %v261
      %288 = vmatprep.subr.mxu0 0.0
      %289 = vmatpush1.msra.mxu0 %v262
      %290 = vmatprep.subr.mxu0 0.0
      %291 = vmatpush1.msra.mxu0 %v263
      %292 = vmatprep.subr.mxu0 0.0
      %293 = vmatpush1.msra.mxu0 %v264
      %294 = vmatprep.subr.mxu0 0.0
      %295 = vmatpush1.msra.mxu0 %v265
      %296 = vmatprep.subr.mxu0 0.0
      %297 = vmatpush1.msra.mxu0 %v266
      %298 = vmatprep.subr.mxu0 0.0
      %299 = vmatpush1.msra.mxu0 %v267
      %300 = vmatprep.subr.mxu0 0.0
      %301 = vmatpush1.msra.mxu0 %v268
      %302 = vmatprep.subr.mxu0 0.0
      %303 = vmatpush1.msra.mxu0 %v269
      %304 = vmatprep.subr.mxu0 0.0
      %305 = vmatpush1.msra.mxu0 %v270
      %306 = vmatprep.subr.mxu0 0.0
      %307 = vmatpush1.msra.mxu0 %v271
      %308 = vmatprep.subr.mxu0 0.0
      %309 = vmatpush1.msra.mxu0 %v272
      %310 = vmatprep.subr.mxu0 0.0
      %311 = vmatpush1.msra.mxu0 %v273
      %312 = vmatprep.subr.mxu0 0.0
      %313 = vmatpush1.msra.mxu0 %v274
      %314 = vmatprep.subr.mxu0 0.0
      %315 = vmatpush1.msra.mxu0 %v275
      %316 = vmatprep.subr.mxu0 0.0
      %317 = vmatpush1.msra.mxu0 %v276
      %318 = vmatprep.subr.mxu0 0.0
      %319 = vmatpush1.msra.mxu0 0.0
      %320 = vmatprep.subr.mxu0 0.0
      %321 = vmatpush1.msra.mxu0 0.0
      %322 = vmatprep.subr.mxu0 0.0
      %323 = vmatpush1.msra.mxu0 0.0
      %324 = vmatprep.subr.mxu0 0.0
      %325 = vmatpush1.msra.mxu0 0.0
      %326 = vmatprep.subr.mxu0 0.0
      %327 = vmatpush1.msra.mxu0 0.0
      %328 = vmatprep.subr.mxu0 0.0
      %329 = vmatpush1.msra.mxu0 0.0
      %330 = vmatprep.subr.mxu0 0.0
      %331 = vmatpush1.msra.mxu0 0.0
      %332 = vmatprep.subr.mxu0 0.0
      %333 = vmatpush1.msra.mxu0 0.0
      %334 = vmatprep.subr.mxu0 0.0
      %335 = vmatpush1.msra.mxu0 0.0
      %336 = vmatprep.subr.mxu0 0.0
      %337 = vmatpush1.msra.mxu0 0.0
      %338 = vmatprep.subr.mxu0 0.0
      %339 = vmatpush1.msra.mxu0 0.0
      %340 = vmatprep.subr.mxu0 0.0
      %341 = vmatpush1.msra.mxu0 0.0
      %342 = vmatprep.subr.mxu0 0.0
      %343 = vmatpush1.msra.mxu0 0.0
      %344 = vmatprep.subr.mxu0 0.0
      %345 = vmatpush1.msra.mxu0 0.0
      %346 = vmatprep.mubr.f32.mxu0 %v278
      %347 = vmatmul.mubr.f32.gmra.mrb[0].mxu0 %v257
      %v348 = vpop.f32.mrb[0].mxu0
      %v349 = vadd.f32 0.0, %v348
      %v350 = vpop.f32.mrb[0].mxu0
      %351 = vmatprep.mubr.f32.mxu0 %v280
      %352 = vmatmul.mubr.f32.gmra.mrb[0].mxu0 %v258
      %v353 = vpop.f32.mrb[0].mxu0
      %v354 = vadd.f32 0.0, %v353
      %v355 = vpop.f32.mrb[0].mxu0
      %356 = vdwg.mxu0
      %v359 = vcombine.high %v349, %v349
      %v361 = vunpack.c.l.s4 1983009808
      %v362 = vunpack.c.0.s8 %v361
      %v363 = vlaneseq
      %v364 = vshrl.u32 %v363, 7
      %v365 = vsub.s32 %v362, %v364
      %v366 = vrot.slane %v349, %v365
      %v368 = vunpack.c.l.s4 1983009808
      %v369 = vunpack.c.0.s8 %v368
      %v370 = vlaneseq
      %v371 = vshrl.u32 %v370, 7
      %v372 = vsub.s32 %v369, %v371
      %v373 = vrot.slane %v359, %v372
      %v374 = vcombine.high %v366, %v366
      %v375 = vcombine.high %v373, %v373
      %v376 = vcombine.high %v354, %v354
      %v378 = vunpack.c.l.s4 1983009808
      %v379 = vunpack.c.0.s8 %v378
      %v380 = vlaneseq
      %v381 = vshrl.u32 %v380, 7
      %v382 = vsub.s32 %v379, %v381
      %v383 = vrot.slane %v354, %v382
      %v385 = vunpack.c.l.s4 1983009808
      %v386 = vunpack.c.0.s8 %v385
      %v387 = vlaneseq
      %v388 = vshrl.u32 %v387, 7
      %v389 = vsub.s32 %v386, %v388
      %v390 = vrot.slane %v376, %v389
      %v391 = vcombine.high %v383, %v383
      %v392 = vcombine.high %v390, %v390
      %v401 = vrot.slane %v366, 7
      %v402 = vrot.slane %v401, 2
      %v403 = vrot.slane %v374, 7
      %v404 = vrot.slane %v403, 2
      %v405 = vrot.slane %v373, 7
      %v406 = vrot.slane %v405, 2
      %v407 = vrot.slane %v375, 7
      %v408 = vrot.slane %v407, 2
      %v409 = vrot.slane %v383, 7
      %v410 = vrot.slane %v409, 2
      %v411 = vrot.slane %v391, 7
      %v412 = vrot.slane %v411, 2
      %v413 = vrot.slane %v390, 7
      %v414 = vrot.slane %v413, 2
      %v415 = vrot.slane %v392, 7
      %v416 = vrot.slane %v415, 2
      %v425 = vmax.f32 %v366, %v402
      %v426 = vmax.f32 %v374, %v404
      %v427 = vmax.f32 %v373, %v406
      %v428 = vmax.f32 %v375, %v408
      %v429 = vmax.f32 %v383, %v410
      %v430 = vmax.f32 %v391, %v412
      %v431 = vmax.f32 %v390, %v414
      %v432 = vmax.f32 %v392, %v416
      %441 = vrot.lane.b32.xlu0 %v425, 96
      %v442 = vpop.permute.xlu0 %441
      %443 = vrot.lane.b32.xlu0 %v426, 96
      %v444 = vpop.permute.xlu0 %443
      %445 = vrot.lane.b32.xlu0 %v427, 96
      %v446 = vpop.permute.xlu0 %445
      %447 = vrot.lane.b32.xlu0 %v428, 96
      %v448 = vpop.permute.xlu0 %447
      %449 = vrot.lane.b32.xlu0 %v429, 96
      %v450 = vpop.permute.xlu0 %449
      %451 = vrot.lane.b32.xlu0 %v430, 96
      %v452 = vpop.permute.xlu0 %451
      %453 = vrot.lane.b32.xlu0 %v431, 96
      %v454 = vpop.permute.xlu0 %453
      %455 = vrot.lane.b32.xlu0 %v432, 96
      %v456 = vpop.permute.xlu0 %455
      %v465 = vmax.f32 %v425, %v442
      %v466 = vmax.f32 %v426, %v444
      %v467 = vmax.f32 %v427, %v446
      %v468 = vmax.f32 %v428, %v448
      %v469 = vmax.f32 %v429, %v450
      %v470 = vmax.f32 %v430, %v452
      %v471 = vmax.f32 %v431, %v454
      %v472 = vmax.f32 %v432, %v456
      %v473 = vld [vmem:[%s2] sm:$0x1]
      %v475 = vlaneseq
      %v476 = vshrl.u32 %v475, 7
      %v477 = vsub.s32 0, %v476
      %v478 = vrot.slane %v473, %v477
      %v479 = vcombine.high %v478, %v478
      %v481 = vunpack.c.l.s4 1983009808
      %v482 = vunpack.c.0.s8 %v481
      %v483 = vlaneseq
      %v484 = vshrl.u32 %v483, 7
      %v485 = vsub.s32 %v482, %v484
      %v486 = vrot.slane %v478, %v485
      %v488 = vunpack.c.l.s4 1983009808
      %v489 = vunpack.c.0.s8 %v488
      %v490 = vlaneseq
      %v491 = vshrl.u32 %v490, 7
      %v492 = vsub.s32 %v489, %v491
      %v493 = vrot.slane %v479, %v492
      %v494 = vcombine.high %v486, %v486
      %v495 = vcombine.high %v493, %v493
      %v496 = vrot.slane %v486, 1
      %v497 = vrot.slane %v494, 1
      %v498 = vrot.slane %v493, 1
      %v499 = vrot.slane %v495, 1
      %v508 = vadd.f32 %v465, %v486
      %v509 = vadd.f32 %v466, %v496
      %v510 = vadd.f32 %v467, %v494
      %v511 = vadd.f32 %v468, %v497
      %v512 = vadd.f32 %v469, %v493
      %v513 = vadd.f32 %v470, %v498
      %v514 = vadd.f32 %v471, %v495
      %v515 = vadd.f32 %v472, %v499
      %v523 = vlaneseq
      %v524 = vshrl.u32 %v523, 7
      %v525 = vsub.s32 0, %v524
      %v526 = vrot.slane %v508, %v525
      %v527 = vlaneseq
      %v528 = vshrl.u32 %v527, 7
      %v529 = vsub.s32 0, %v528
      %v530 = vrot.slane %v509, %v529
      %v531 = vlaneseq
      %v532 = vshrl.u32 %v531, 7
      %v533 = vsub.s32 0, %v532
      %v534 = vrot.slane %v510, %v533
      %v535 = vlaneseq
      %v536 = vshrl.u32 %v535, 7
      %v537 = vsub.s32 0, %v536
      %v538 = vrot.slane %v511, %v537
      %v539 = vlaneseq
      %v540 = vshrl.u32 %v539, 7
      %v541 = vsub.s32 0, %v540
      %v542 = vrot.slane %v512, %v541
      %v543 = vlaneseq
      %v544 = vshrl.u32 %v543, 7
      %v545 = vsub.s32 0, %v544
      %v546 = vrot.slane %v513, %v545
      %v547 = vlaneseq
      %v548 = vshrl.u32 %v547, 7
      %v549 = vsub.s32 0, %v548
      %v550 = vrot.slane %v514, %v549
      %vm551 = vcmask 1042434
      %v552 = vsel %vm551, %v530, %v526
      %vm553 = vcmask 1043459
      %v554 = vsel %vm553, %v534, %v552
      %vm555 = vcmask 1044484
      %v556 = vsel %vm555, %v538, %v554
      %vm557 = vcmask 1045509
      %v558 = vsel %vm557, %v542, %v556
      %vm559 = vcmask 1046534
      %v560 = vsel %vm559, %v546, %v558
      %vm561 = vcmask 1047559
      %v562 = vsel %vm561, %v550, %v560
      %v564 = vsel %vm227, 0.0, %v562
      %v566 = vlaneseq
      %v567 = vshrl.u32 %v566, 7
      %v568 = vsub.s32 0, %v567
      %v569 = vrot.slane %v515, %v568
      %vm570 = vcmask 1041409
      %v571 = vsel %vm570, %v534, %v530
      %v572 = vsel %vm551, %v538, %v571
      %v573 = vsel %vm553, %v542, %v572
      %v574 = vsel %vm555, %v546, %v573
      %v575 = vsel %vm557, %v550, %v574
      %v576 = vsel %vm559, %v569, %v575
      %v578 = vsel %vm234, %v576, 0.0
      %v579 = vsel %vm570, %v530, %v526
      %v580 = vsel %vm551, %v534, %v579
      %v581 = vsel %vm553, %v538, %v580
      %v582 = vsel %vm555, %v542, %v581
      %v583 = vsel %vm557, %v546, %v582
      %v584 = vsel %vm559, %v550, %v583
      %v585 = vsel %vm561, %v569, %v584
      %586 = vrot.lane.b32.xlu0 %v585, 32
      %v587 = vpop.permute.xlu0 %586
      %590 = vrot.lane.b32.xlu0 %v578, 64
      %v591 = vpop.permute.xlu0 %590
      %vm593 = vcmask 261120
      %v594 = vsel %vm593, %v564, %v587
      %vm595 = vcmask 523264
      %v596 = vsel %vm595, %v594, %v591
      %v597 = vld [vmem:[%s3] sm:$0xff]
      %v598 = vld [vmem:[%s3 + $0x8] sm:$0xff]
      %v599 = vld [vmem:[%s3 + $0x10] sm:$0xff]
      %v600 = vld [vmem:[%s3 + $0x18] sm:$0xff]
      %v601 = vld [vmem:[%s3 + $0x20] sm:$0xff]
      %v602 = vld [vmem:[%s3 + $0x28] sm:$0xff]
      %v603 = vld [vmem:[%s3 + $0x30] sm:$0xff]
      %v604 = vld [vmem:[%s3 + $0x38] sm:$0xff]
      %v605 = vld [vmem:[%s3 + $0x40] sm:$0xff]
      %v606 = vld [vmem:[%s3 + $0x48] sm:$0xff]
      %v607 = vld [vmem:[%s3 + $0x50] sm:$0xff]
      %v608 = vld [vmem:[%s3 + $0x58] sm:$0xff]
      %v610 = vsel %vm256, %v596, 0
      %612 = vmatprep.subr.mxu0 0.0
      %613 = vmatpush1.msra.mxu0 %v597
      %614 = vmatprep.subr.mxu0 0.0
      %615 = vmatpush1.msra.mxu0 %v598
      %616 = vmatprep.subr.mxu0 0.0
      %617 = vmatpush1.msra.mxu0 %v599
      %618 = vmatprep.subr.mxu0 0.0
      %619 = vmatpush1.msra.mxu0 %v600
      %620 = vmatprep.subr.mxu0 0.0
      %621 = vmatpush1.msra.mxu0 %v601
      %622 = vmatprep.subr.mxu0 0.0
      %623 = vmatpush1.msra.mxu0 %v602
      %624 = vmatprep.subr.mxu0 0.0
      %625 = vmatpush1.msra.mxu0 %v603
      %626 = vmatprep.subr.mxu0 0.0
      %627 = vmatpush1.msra.mxu0 %v604
      %628 = vmatprep.subr.mxu0 0.0
      %629 = vmatpush1.msra.mxu0 %v605
      %630 = vmatprep.subr.mxu0 0.0
      %631 = vmatpush1.msra.mxu0 %v606
      %632 = vmatprep.subr.mxu0 0.0
      %633 = vmatpush1.msra.mxu0 %v607
      %634 = vmatprep.subr.mxu0 0.0
      %635 = vmatpush1.msra.mxu0 %v608
      %636 = vmatprep.subr.mxu0 0.0
      %637 = vmatpush1.msra.mxu0 0.0
      %638 = vmatprep.subr.mxu0 0.0
      %639 = vmatpush1.msra.mxu0 0.0
      %640 = vmatprep.subr.mxu0 0.0
      %641 = vmatpush1.msra.mxu0 0.0
      %642 = vmatprep.subr.mxu0 0.0
      %643 = vmatpush1.msra.mxu0 0.0
      %644 = vmatprep.subr.mxu0 0.0
      %645 = vmatpush1.msra.mxu0 0.0
      %646 = vmatprep.subr.mxu0 0.0
      %647 = vmatpush1.msra.mxu0 0.0
      %648 = vmatprep.subr.mxu0 0.0
      %649 = vmatpush1.msra.mxu0 0.0
      %650 = vmatprep.subr.mxu0 0.0
      %651 = vmatpush1.msra.mxu0 0.0
      %652 = vmatprep.subr.mxu0 0.0
      %653 = vmatpush1.msra.mxu0 0.0
      %654 = vmatprep.subr.mxu0 0.0
      %655 = vmatpush1.msra.mxu0 0.0
      %656 = vmatprep.subr.mxu0 0.0
      %657 = vmatpush1.msra.mxu0 0.0
      %658 = vmatprep.subr.mxu0 0.0
      %659 = vmatpush1.msra.mxu0 0.0
      %660 = vmatprep.subr.mxu0 0.0
      %661 = vmatpush1.msra.mxu0 0.0
      %662 = vmatprep.subr.mxu0 0.0
      %663 = vmatpush1.msra.mxu0 0.0
      %664 = vmatprep.subr.mxu0 0.0
      %665 = vmatpush1.msra.mxu0 0.0
      %666 = vmatprep.subr.mxu0 0.0
      %667 = vmatpush1.msra.mxu0 0.0
      %668 = vmatprep.subr.mxu0 0.0
      %669 = vmatpush1.msra.mxu0 0.0
      %670 = vmatprep.subr.mxu0 0.0
      %671 = vmatpush1.msra.mxu0 0.0
      %672 = vmatprep.subr.mxu0 0.0
      %673 = vmatpush1.msra.mxu0 0.0
      %674 = vmatprep.subr.mxu0 0.0
      %675 = vmatpush1.msra.mxu0 0.0
      %676 = vmatprep.mubr.f32.mxu0 0.0
      %677 = vmatmul.mubr.f32.gmra.mrb[0].mxu0 %v610
      %v678 = vpop.f32.mrb[0].mxu0
      %v679 = vadd.f32 0.0, %v678
      %v680 = vpop.f32.mrb[0].mxu0
      %681 = vdwg.mxu0
      %v683 = vcombine.high %v679, %v679
      %v685 = vunpack.c.l.s4 1983009808
      %v686 = vunpack.c.0.s8 %v685
      %v687 = vlaneseq
      %v688 = vshrl.u32 %v687, 7
      %v689 = vsub.s32 %v686, %v688
      %v690 = vrot.slane %v679, %v689
      %v692 = vunpack.c.l.s4 1983009808
      %v693 = vunpack.c.0.s8 %v692
      %v694 = vlaneseq
      %v695 = vshrl.u32 %v694, 7
      %v696 = vsub.s32 %v693, %v695
      %v697 = vrot.slane %v683, %v696
      %v698 = vcombine.high %v690, %v690
      %v699 = vcombine.high %v697, %v697
      %v704 = vrot.slane %v690, 7
      %v705 = vrot.slane %v704, 2
      %v706 = vrot.slane %v698, 7
      %v707 = vrot.slane %v706, 2
      %v708 = vrot.slane %v697, 7
      %v709 = vrot.slane %v708, 2
      %v710 = vrot.slane %v699, 7
      %v711 = vrot.slane %v710, 2
      %v716 = vmax.f32 %v690, %v705
      %v717 = vmax.f32 %v698, %v707
      %v718 = vmax.f32 %v697, %v709
      %v719 = vmax.f32 %v699, %v711
      %724 = vrot.lane.b32.xlu0 %v716, 96
      %v725 = vpop.permute.xlu0 %724
      %726 = vrot.lane.b32.xlu0 %v717, 96
      %v727 = vpop.permute.xlu0 %726
      %728 = vrot.lane.b32.xlu0 %v718, 96
      %v729 = vpop.permute.xlu0 %728
      %730 = vrot.lane.b32.xlu0 %v719, 96
      %v731 = vpop.permute.xlu0 %730
      %v736 = vmax.f32 %v716, %v725
      %v737 = vmax.f32 %v717, %v727
      %v738 = vmax.f32 %v718, %v729
      %v739 = vmax.f32 %v719, %v731
      %v740 = vld [vmem:[%s4] sm:$0x1]
      %v742 = vlaneseq
      %v743 = vshrl.u32 %v742, 7
      %v744 = vsub.s32 0, %v743
      %v745 = vrot.slane %v740, %v744
      %v747 = vunpack.c.l.s4 1983009808
      %v748 = vunpack.c.0.s8 %v747
      %v749 = vlaneseq
      %v750 = vshrl.u32 %v749, 7
      %v751 = vsub.s32 %v748, %v750
      %v752 = vrot.slane %v745, %v751
      %v753 = vcombine.high %v752, %v752
      %v754 = vrot.slane %v752, 1
      %v755 = vrot.slane %v753, 1
      %v760 = vadd.f32 %v736, %v752
      %v761 = vadd.f32 %v737, %v754
      %v762 = vadd.f32 %v738, %v753
      %v763 = vadd.f32 %v739, %v755
      %v768 = vlaneseq
      %v769 = vshrl.u32 %v768, 7
      %v770 = vsub.s32 0, %v769
      %v771 = vrot.slane %v760, %v770
      %v772 = vlaneseq
      %v773 = vshrl.u32 %v772, 7
      %v774 = vsub.s32 0, %v773
      %v775 = vrot.slane %v761, %v774
      %v776 = vlaneseq
      %v777 = vshrl.u32 %v776, 7
      %v778 = vsub.s32 0, %v777
      %v779 = vrot.slane %v762, %v778
      %v780 = vlaneseq
      %v781 = vshrl.u32 %v780, 7
      %v782 = vsub.s32 0, %v781
      %v783 = vrot.slane %v763, %v782
      %v784 = vsel %vm570, %v775, %v771
      %v785 = vsel %vm551, %v779, %v784
      %v786 = vsel %vm553, %v783, %v785
      %vm788 = vcmask 257024
      %789 = vst.msk [vmem:[%s222] sm:$0xf] %vm788, %v786
      %p790 = scmp.lt.s32.totalorder %s16, 1
      %s791 = scalar_select %p790, %s16, 1
      %s792 = smul.addr %s791, 4
      %s793 = scalar_lea.vmem %s5, %s792
      // Predicated region
      $region41: #{net_forward_impl.1} parent=39 // pred_check
        %p794 = pneg %p144
      $region42: #{net_forward_impl.1} parent=39 // pred_check_branch
        %796 = sbr.rel (%p794) target = $region44
      $region43: #{net_forward_impl.1} parent=39 // pred_region
        _
      $region44: #{net_forward_impl.1} parent=39 // pred_fallthru
        _
    $region40: #{net_forward_impl.1} parent=5 // pred_fallthru
      _
    %p797 = scmp.le.s32.totalorder 2, %s11
    // Predicated region
    $region45: #{net_forward_impl.1} parent=5 // pred_check
      %p798 = pneg %p797
    $region46: #{net_forward_impl.1} parent=5 // pred_check_branch
      %800 = sbr.rel (%p798) target = $region48
    $region47: #{net_forward_impl.1} parent=5 // pred_region
      %s801 = ssub.s32 %s11, 2
      // Predicated region
      $region49: #{net_forward_impl.1} parent=47 // pred_check
        %p802 = pneg %p150
      $region50: #{net_forward_impl.1} parent=47 // pred_check_branch
        %804 = sbr.rel (%p802) target = $region52
      $region51: #{net_forward_impl.1} parent=47 // pred_region
        %p805 = scmp.lt.s32.totalorder %s17, 1
        %s806 = scalar_select %p805, %s17, 1
        %s807 = smul.addr %s806, 4
        %s808 = scalar_lea.vmem %s5, %s807
      $region52: #{net_forward_impl.1} parent=47 // pred_fallthru
        _
    $region48: #{net_forward_impl.1} parent=5 // pred_fallthru
      _
  $region6: #{net_forward_impl.1} parent=0 // loop_footer
    %s15 = sadd.s32 1, %s11
  $region7: #{net_forward_impl.1} parent=0 // loop_footer_branch
    %10 = sbr.rel target = $region3
  $region8: #{net_forward_impl.1} parent=0 // loop_exit
    _

</llo_original>
